<compile_context>
chip_gen: v5e
topology: v5e:2x2
jax: 0.10.0
libtpu: 0.0.40
codegen_flags: <defaults>
</compile_context>

<pallas_src>
import functools

import jax
import jax.numpy as jnp
from jax.experimental import pallas as pl
from jax.experimental.pallas import tpu as pltpu


_VMEM_TILE_BUDGET = 32 * 1024 * 1024   # bytes for pipelined tiles + f32 temps
_VMEM_LIMIT_BYTES = 48 * 1024 * 1024   # scoped VMEM ceiling (fits v5e/v6e/v7x)
_MIN_STEP_BYTES = 2 * 1024 * 1024      # never shrink a step below this much input


def _rmsnorm_kernel(x_ref, g_ref, o_ref, *, scale):
    # x_ref: (block_rows, dim), g_ref: (1, dim), o_ref: (block_rows, dim)
    x = x_ref[...]
    xf = x.astype(jnp.float32)

    # L2 norm along the last axis; clamp ss at 1e-24 == clamp ||x|| at 1e-12
    # (matches F.normalize(p=2, dim=-1, eps=1e-12)).
    ss = jnp.sum(xf * xf, axis=-1, keepdims=True)
    inv = jax.lax.rsqrt(jnp.maximum(ss, 1e-24)) * scale   # EUP rsqrt, sqrt(dim) folded in

    if jnp.dtype(o_ref.dtype) == jnp.dtype(jnp.float32):
        g1 = g_ref[...].astype(jnp.float32) + 1.0
        o_ref[...] = xf * inv * g1
    else:
        # Reduction stays f32; output chain in the storage dtype so no
        # full-tile f32 result temp is materialized.
        g1 = (g_ref[...].astype(jnp.float32) + 1.0).astype(o_ref.dtype)
        o_ref[...] = (x * inv.astype(o_ref.dtype)) * g1


def _round_up(x, m):
    return (x + m - 1) // m * m


def _is_multi_tc_chip():
    """True when one Pallas grid spans multiple TensorCores (v7x-style)."""
    try:
        kind = jax.devices()[0].device_kind.lower()
    except Exception:
        return False
    return ("v7" in kind) or ("7x" in kind)


def _choose_block_rows(rows, dim, itemsize):
    """Largest row tile that fits the VMEM budget, with enough grid steps."""
    row_bytes = dim * itemsize
    # VMEM per row: double-buffered input + output tiles, plus ~2 f32-wide
    # full-tile temporaries for the in-kernel intermediates (conservative).
    per_row_vmem = 4 * row_bytes + 8 * dim
    br = max(8, (_VMEM_TILE_BUDGET // per_row_vmem) // 8 * 8)

    rows8 = _round_up(rows, 8)
    br = min(br, rows8)

    # Guarantee enough grid steps for DMA/compute/writeback overlap (and, on
    # multi-TC chips, >= ~4 steps per core after the megacore split), but
    # never shrink a step below ~_MIN_STEP_BYTES of input traffic.
    min_steps = 8 if _is_multi_tc_chip() else 3
    if pl.cdiv(rows8, br) < min_steps:
        br_split = max(8, _round_up(pl.cdiv(rows8, min_steps), 8))
        br_floor = min(br, max(8, (_MIN_STEP_BYTES // max(row_bytes, 1)) // 8 * 8))
        br = min(br, max(br_split, br_floor))
    return br


def rmsnorm(x, gamma, *, block_rows=None):
    """RMSNorm forward. x: (..., dim), gamma: (dim,)."""
    orig_shape = x.shape
    dim = orig_shape[-1]
    rows = 1
    for s in orig_shape[:-1]:
        rows *= s
    x2d = x.reshape(rows, dim)
    g2d = gamma.reshape(1, dim)

    scale = float(dim) ** 0.5
    itemsize = jnp.dtype(x.dtype).itemsize

    if block_rows is None:
        block_rows = _choose_block_rows(rows, dim, itemsize)
    grid = (pl.cdiv(rows, block_rows),)   # partial last block: OOB rows never stored

    cost = pl.CostEstimate(
        flops=4 * rows * dim,
        transcendentals=rows,
        bytes_accessed=2 * rows * dim * itemsize + dim * itemsize,
    )

    out = pl.pallas_call(
        functools.partial(_rmsnorm_kernel, scale=scale),
        out_shape=jax.ShapeDtypeStruct((rows, dim), x.dtype),
        grid_spec=pltpu.PrefetchScalarGridSpec(
            num_scalar_prefetch=0,
            grid=grid,
            in_specs=[
                pl.BlockSpec((block_rows, dim), lambda i: (i, 0)),
                pl.BlockSpec((1, dim), lambda i: (0, 0)),
            ],
            out_specs=pl.BlockSpec((block_rows, dim), lambda i: (i, 0)),
        ),
        compiler_params=pltpu.CompilerParams(
            dimension_semantics=("parallel",),
            vmem_limit_bytes=_VMEM_LIMIT_BYTES,
        ),
        cost_estimate=cost,
    )(x2d, g2d)

    return out.reshape(orig_shape)


def rmsnorm_reference(x, gamma):
    scale = float(x.shape[-1]) ** 0.5
    xf = x.astype(jnp.float32)
    norm = jnp.sqrt(jnp.sum(xf * xf, axis=-1, keepdims=True))
    y = xf / jnp.maximum(norm, 1e-12) * scale * (gamma.astype(jnp.float32) + 1.0)
    return y.astype(x.dtype)


if __name__ == "__main__":
    key = jax.random.PRNGKey(0)
    batch, seq, dim = 2, 8, 32

    kx, kg, kr = jax.random.split(key, 3)
    x = jax.random.normal(kx, (batch, seq, dim), dtype=jnp.float32)
    # PyTorch init is zeros(dim); perturb deterministically so gamma matters,
    # then also test the exact zeros init.
    gamma = 0.1 * jax.random.normal(kg, (dim,), dtype=jnp.float32)

    out = rmsnorm(x, gamma)
    jax.block_until_ready(out)
    ref = rmsnorm_reference(x, gamma)
    assert jnp.allclose(out, ref, atol=1e-5, rtol=1e-5), "mismatch vs reference"

    gamma_zero = jnp.zeros((dim,), dtype=jnp.float32)  # matches nn.Parameter(torch.zeros(dim))
    out0 = rmsnorm(x, gamma_zero)
    jax.block_until_ready(out0)
    ref0 = rmsnorm_reference(x, gamma_zero)
    assert jnp.allclose(out0, ref0, atol=1e-5, rtol=1e-5), "mismatch vs reference (zero gamma)"

    # Ragged row count (rows = 15, not a multiple of 8) exercises the
    # partial-last-block path (no padding, no trailing slice).
    xr = jax.random.normal(kr, (3, 5, dim), dtype=jnp.float32)
    outr = rmsnorm(xr, gamma)
    jax.block_until_ready(outr)
    refr = rmsnorm_reference(xr, gamma)
    assert jnp.allclose(outr, refr, atol=1e-5, rtol=1e-5), "mismatch vs reference (ragged rows)"

    # bf16 path (output chain runs in bf16; loose tolerance accordingly).
    xb = x.astype(jnp.bfloat16)
    outb = rmsnorm(xb, gamma)
    jax.block_until_ready(outb)
    refb = rmsnorm_reference(xb, gamma).astype(jnp.float32)
    assert jnp.allclose(outb.astype(jnp.float32), refb, atol=5e-2, rtol=5e-2), \
        "mismatch vs reference (bf16)"

    print("KERNEL_OK")
</pallas_src>

<mosaic_0001>
module attributes {stable_mosaic.version = 11 : i64} {
  func.func @_rmsnorm_kernel(%arg0: i32, %arg1: memref<16x32xf32, #tpu.memory_space<vmem>>, %arg2: memref<1x32xf32, #tpu.memory_space<vmem>>, %arg3: memref<16x32xf32, #tpu.memory_space<vmem>>) attributes {dimension_semantics = [#tpu.dimension_semantics<parallel>], iteration_bounds = array<i64: 1>, scalar_prefetch = 0 : i64, scratch_operands = 0 : i64, tpu.core_type = #tpu.core_type<tc>, window_params = [{transform_indices = @transform_0, window_bounds = array<i64: 16, 32>}, {pipeline_mode = #tpu.pipeline_mode<synchronous>, transform_indices = @transform_1, window_bounds = array<i64: 1, 32>}, {transform_indices = @transform_2, window_bounds = array<i64: 16, 32>}]} {
    %c0 = arith.constant 0 : index
    %c0_0 = arith.constant 0 : index
    %0 = vector.load %arg1[%c0, %c0_0] : memref<16x32xf32, #tpu.memory_space<vmem>>, vector<16x32xf32>
    %1 = arith.mulf %0, %0 : vector<16x32xf32>
    %cst = arith.constant dense<0.000000e+00> : vector<16xf32>
    %2 = vector.multi_reduction <add>, %1, %cst [1] : vector<16x32xf32> to vector<16xf32>
    %3 = vector.shape_cast %2 : vector<16xf32> to vector<16x1xf32>
    %cst_1 = arith.constant 1.000000e-24 : f32
    %4 = vector.broadcast %cst_1 : f32 to vector<16x1xf32>
    %5 = arith.maximumf %3, %4 : vector<16x1xf32>
    %6 = math.rsqrt %5 : vector<16x1xf32>
    %cst_2 = arith.constant 5.65685415 : f32
    %7 = vector.broadcast %cst_2 : f32 to vector<16x1xf32>
    %8 = arith.mulf %6, %7 : vector<16x1xf32>
    %c0_3 = arith.constant 0 : index
    %c0_4 = arith.constant 0 : index
    %9 = vector.load %arg2[%c0_3, %c0_4] : memref<1x32xf32, #tpu.memory_space<vmem>>, vector<1x32xf32>
    %cst_5 = arith.constant 1.000000e+00 : f32
    %10 = vector.broadcast %cst_5 : f32 to vector<1x32xf32>
    %11 = arith.addf %9, %10 : vector<1x32xf32>
    %12 = vector.broadcast %8 : vector<16x1xf32> to vector<16x32xf32>
    %13 = arith.mulf %0, %12 : vector<16x32xf32>
    %14 = vector.broadcast %11 : vector<1x32xf32> to vector<16x32xf32>
    %15 = arith.mulf %13, %14 : vector<16x32xf32>
    %c0_6 = arith.constant 0 : index
    %c0_7 = arith.constant 0 : index
    %16 = vector.load %arg3[%c0_6, %c0_7] : memref<16x32xf32, #tpu.memory_space<vmem>>, vector<16x32xf32>
    tpu.vector_store %arg3[%c0_6, %c0_7], %15 {strides = array<i32>} : memref<16x32xf32, #tpu.memory_space<vmem>>, vector<16x32xf32>,
    return
  }
  func.func @transform_0(%arg0: i32) -> (i32, i32) {
    %c0_i32 = arith.constant 0 : i32
    %c0_i32_0 = arith.constant 0 : i32
    return %arg0, %c0_i32 : i32, i32
  }
  func.func @transform_1(%arg0: i32) -> (i32, i32) {
    %c0_i32 = arith.constant 0 : i32
    %c0_i32_0 = arith.constant 0 : i32
    %c0_i32_1 = arith.constant 0 : i32
    return %c0_i32, %c0_i32_0 : i32, i32
  }
  func.func @transform_2(%arg0: i32) -> (i32, i32) {
    %c0_i32 = arith.constant 0 : i32
    %c0_i32_0 = arith.constant 0 : i32
    return %arg0, %c0_i32 : i32, i32
  }
}

</mosaic_0001>

<llo_original>
// kernel: tpu_custom_call.1
$region0: #{tpu_custom_call.1}
  #allocation0 [shape = 'u32[]', space=smem, size = 0x4, offset = 0x4, fixed_abs, tag = 'smem constant byte address 0x4 - core index']
  #allocation1 [shape = 'u32[72,128]{1,0:T(1,128)}', space=vmem, size = 0x9000, scoped, tag = 'internal scratch']
  %s0 = inlined_call_operand.hbm [shape: f32[16,32], index: 0, kind: input, shape index: {}]
  %s1 = inlined_call_operand.hbm [shape: f32[1,32], index: 1, kind: input, shape index: {}]
  %s2 = inlined_call_operand.hbm [shape: f32[16,32], index: 2, kind: output, shape index: {}]
  %s3 = sld [smem:[#allocation0]]
  $region26: #{tpu_custom_call.1} parent=0
    _
  %s5 = ssub.s32 1, %s3
  %s6 = scalar_select 0, %s5, %s3
  $region1: #{tpu_custom_call.1} parent=0
    #allocation2 [shape = 'u8[8192]{0}', space=vmem, size = 0x2000, scoped, tag = 'input window, operand 0, single buffered']
    #allocation3 [shape = 's32[1]{0}', space=sflag, size = 0x4, scoped, tag = 'scoped memory for tpu_custom_call.1']
    #allocation4 [shape = 's32[1]{0}', space=sflag, size = 0x4, scoped, tag = 'scoped memory for tpu_custom_call.1']
    #allocation5 [shape = 'u8[512]{0}', space=vmem, size = 0x400, scoped, tag = 'input window, operand 1, single buffered']
    #allocation6 [shape = 's32[1]{0}', space=sflag, size = 0x4, scoped, tag = 'scoped memory for tpu_custom_call.1']
    #allocation7 [shape = 'u8[8192]{0}', space=vmem, size = 0x2000, scoped, tag = 'output window, operand 0, single buffered']
    %7 = vsyncpa [#allocation3], 0
    %8 = vsyncpa [#allocation6], 0
    %9 = vsyncpa [#allocation4], 0
    // Predicated region
    $region2: #{tpu_custom_call.1} parent=1 // pred_check
      _
    $region3: #{tpu_custom_call.1} parent=1 // pred_check_branch
      %11 = sbr.rel (0) target = $region5
    $region4: #{tpu_custom_call.1} parent=1 // pred_region
      %13 = vsyncadd [#allocation3], 0
      %s14 = sshll.u32 %s0, 4
      %s15 = int_to_ptr.hbm [resolvable:$true] %s14
      %s16 = sshll.u32 [#allocation2], 4
      %s17 = int_to_ptr.vmem [resolvable:$true] %s16
      %22 = dma.hbm_to_vmem [thread:$0]  %s15, 256, %s17, [#allocation3], 128, 128, 8
    $region5: #{tpu_custom_call.1} parent=1 // pred_fallthru
      _
    // Predicated region
    $region6: #{tpu_custom_call.1} parent=1 // pred_check
      _
    $region7: #{tpu_custom_call.1} parent=1 // pred_check_branch
      %24 = sbr.rel (0) target = $region9
    $region8: #{tpu_custom_call.1} parent=1 // pred_region
      %26 = vsyncadd [#allocation6], 0
      %s28 = sshll.u32 %s1, 4
      %s29 = int_to_ptr.hbm [resolvable:$true] %s28
      %s30 = sshll.u32 [#allocation5], 4
      %s31 = int_to_ptr.vmem [resolvable:$true] %s30
      %33 = dma.hbm_to_vmem [thread:$0]  %s29, 16, %s31, [#allocation6]
    $region9: #{tpu_custom_call.1} parent=1 // pred_fallthru
      _
    // Predicated region
    $region10: #{tpu_custom_call.1} parent=1 // pred_check
      _
    $region11: #{tpu_custom_call.1} parent=1 // pred_check_branch
      %35 = sbr.rel (0) target = $region13
    $region12: #{tpu_custom_call.1} parent=1 // pred_region
      %37 = dma.done [#allocation3], 256
    $region13: #{tpu_custom_call.1} parent=1 // pred_fallthru
      _
    // Predicated region
    $region14: #{tpu_custom_call.1} parent=1 // pred_check
      _
    $region15: #{tpu_custom_call.1} parent=1 // pred_check_branch
      %39 = sbr.rel (0) target = $region17
    $region16: #{tpu_custom_call.1} parent=1 // pred_region
      %41 = dma.done [#allocation6], 16
    $region17: #{tpu_custom_call.1} parent=1 // pred_fallthru
      _
    %v42 = vld [vmem:[#allocation2] sm:$0xff]
    %v43 = vld [vmem:[#allocation2 + $0x8] sm:$0xff]
    %v44 = vmul.f32 %v42, %v42
    %v45 = vmul.f32 %v43, %v43
    %vm46 = vcmask 261120
    %v47 = vsel %vm46, %v44, 0.0
    %48 = vadd.xlane.f32.xlu0 %v47
    %v49 = vpop.xlane.xlu0 %48
    %v50 = vsel %vm46, %v45, 0.0
    %51 = vadd.xlane.f32.xlu0 %v50
    %v52 = vpop.xlane.xlu0 %51
    %v53 = vmax.f32 %v49, 1e-24
    %v54 = vmax.f32 %v52, 1e-24
    %v55 = vrsqrt.pop %v53
    %v56 = vmul.f32 %v55, %v53
    %v57 = vmul.f32 %v56, %v55
    %v58 = vmul.f32 0.5, %v57
    %v59 = vsub.f32 1.5, %v58
    %v60 = vmul.f32 %v55, %v59
    %vm61 = vweird.f32 %v53
    %vm62 = vweird.f32 %v55
    %vm63 = vmor %vm61, %vm62
    %v64 = vsel %vm63, %v55, %v60
    %v65 = vrsqrt.pop %v54
    %v66 = vmul.f32 %v65, %v54
    %v67 = vmul.f32 %v66, %v65
    %v68 = vmul.f32 0.5, %v67
    %v69 = vsub.f32 1.5, %v68
    %v70 = vmul.f32 %v65, %v69
    %vm71 = vweird.f32 %v54
    %vm72 = vweird.f32 %v65
    %vm73 = vmor %vm71, %vm72
    %v74 = vsel %vm73, %v65, %v70
    %v75 = vmul.f32 %v64, 5.656854
    %v76 = vmul.f32 %v74, 5.656854
    %v77 = vld [vmem:[#allocation5] sm:$0x1]
    %v78 = vadd.f32 %v77, 1.0
    %v79 = vmul.f32 %v42, %v75
    %v80 = vmul.f32 %v43, %v76
    %v82 = vperm.slane %v78, 0
    %v84 = vmul.f32 %v79, %v82
    %v85 = vmul.f32 %v80, %v82
    %86 = vst.msk [vmem:[#allocation7] sm:$0xff] %vm46, %v84
    %87 = vst.msk [vmem:[#allocation7 + $0x8] sm:$0xff] %vm46, %v85
    // Predicated region
    $region18: #{tpu_custom_call.1} parent=1 // pred_check
      _
    $region19: #{tpu_custom_call.1} parent=1 // pred_check_branch
      %89 = sbr.rel (0) target = $region21
    $region20: #{tpu_custom_call.1} parent=1 // pred_region
      %91 = vsyncadd [#allocation4], 0
      %s92 = sshll.u32 [#allocation7], 4
      %s93 = int_to_ptr.vmem [resolvable:$true] %s92
      %s94 = sshll.u32 %s2, 4
      %s95 = int_to_ptr.hbm [resolvable:$true] %s94
      %100 = dma.vmem_to_hbm [thread:$0]  %s93, 256, %s95, [#allocation4], 128, 128, 8
    $region21: #{tpu_custom_call.1} parent=1 // pred_fallthru
      _
    // Predicated region
    $region22: #{tpu_custom_call.1} parent=1 // pred_check
      _
    $region23: #{tpu_custom_call.1} parent=1 // pred_check_branch
      %102 = sbr.rel (0) target = $region25
    $region24: #{tpu_custom_call.1} parent=1 // pred_region
      %104 = dma.done [#allocation4], 256
    $region25: #{tpu_custom_call.1} parent=1 // pred_fallthru
      _
    %105 = vsyncpa [#allocation3], 1
    %106 = vsyncpa [#allocation6], 1
    %107 = vsyncpa [#allocation4], 1

</llo_original>
